<compile_context>
chip_gen: v7x
topology: tpu7x:2x2x1
jax: 0.10.0
libtpu: 0.0.40
codegen_flags: <defaults>
</compile_context>

<pallas_src>
import functools

import jax
import jax.numpy as jnp
from jax.experimental import pallas as pl
from jax.experimental.pallas import tpu as pltpu


def _cdiv(a, b):
    return -(-a // b)


def _round_up(n, m):
    return ((n + m - 1) // m) * m


def _vmem_capacity_bytes():
    """Physical per-core VMEM (falls back to the smallest modern chip, v7x)."""
    try:
        info = pltpu.get_tpu_info()
        cap = getattr(info, "vmem_capacity_bytes", None)
        if cap:
            return int(cap)
    except Exception:
        pass
    return 64 << 20


# ---------------------------------------------------------------------------
# Kernels
# ---------------------------------------------------------------------------

def _mlp_kernel(x_ref, w1_ref, b1_ref, w2_ref, b2_ref, o_ref):
    """Fused 2-layer MLP; weights fully VMEM-resident (no hidden-dim tiling)."""
    x = x_ref[...].astype(w1_ref.dtype)                       # bf16 MXU input
    h = jnp.dot(x, w1_ref[...], preferred_element_type=jnp.float32)
    h = jax.nn.sigmoid(h + b1_ref[...])                       # f32 bias + sigmoid
    y = jnp.dot(h.astype(w2_ref.dtype), w2_ref[...],
                preferred_element_type=jnp.float32)
    o_ref[...] = (y + b2_ref[...]).astype(o_ref.dtype)


def _mlp_kernel_htiled(x_ref, w1_ref, b1_ref, w2_ref, b2_ref, o_ref, acc_ref):
    """Same MLP with the hidden dim tiled over grid axis 1 (large weights)."""
    hk = pl.program_id(1)
    x = x_ref[...].astype(w1_ref.dtype)
    h = jnp.dot(x, w1_ref[...], preferred_element_type=jnp.float32)
    h = jax.nn.sigmoid(h + b1_ref[...])
    y = jnp.dot(h.astype(w2_ref.dtype), w2_ref[...],
                preferred_element_type=jnp.float32)

    @pl.when(hk == 0)
    def _():
        acc_ref[...] = jnp.zeros_like(acc_ref)

    acc_ref[...] += y

    @pl.when(hk == pl.num_programs(1) - 1)
    def _():
        o_ref[...] = (acc_ref[...] + b2_ref[...]).astype(o_ref.dtype)


# ---------------------------------------------------------------------------
# Parameter preparation (done ONCE, not per forward call)
# ---------------------------------------------------------------------------

def prepare_mlp_params(w1, b1, w2, b2, *, compute_dtype=jnp.bfloat16,
                       feature_align=256):
    """Pad / cast MLP parameters once.

    Expects weights pre-transposed to (in_features, out_features), i.e.
    PyTorch `layer.weight.T`.
    """
    in_size, hidden = w1.shape
    assert w2.shape[0] == hidden, (
        f"w2 must be (hidden, out) = ({hidden}, ...), got {w2.shape}; "
        "did you forget to transpose the PyTorch weight?")
    out_size = w2.shape[1]
    assert b1.shape == (hidden,), b1.shape
    assert b2.shape == (out_size,), b2.shape

    K = _round_up(in_size, 128)            # contraction dim: lane-aligned
    H = _round_up(hidden, feature_align)   # MXU N dims: 256-aligned (v6e/v7x)
    O = _round_up(out_size, feature_align)

    w1p = jnp.zeros((K, H), compute_dtype).at[:in_size, :hidden].set(
        w1.astype(compute_dtype))
    b1p = jnp.zeros((1, H), jnp.float32).at[:, :hidden].set(
        b1.astype(jnp.float32))
    w2p = jnp.zeros((H, O), compute_dtype).at[:hidden, :out_size].set(
        w2.astype(compute_dtype))
    b2p = jnp.zeros((1, O), jnp.float32).at[:, :out_size].set(
        b2.astype(jnp.float32))

    return dict(w1=w1p, b1=b1p, w2=w2p, b2=b2p,
                in_size=in_size, hidden=hidden, out_size=out_size,
                K=K, H=H, O=O, compute_dtype=compute_dtype)


def _choose_batch_tiling(B, *, max_batch_tile=512, min_grid_steps=2):
    """Balanced batch tiles; >=2 grid steps (v7x megacore) when B is non-tiny."""
    steps = _cdiv(B, max_batch_tile)
    if B >= 2 * 16:                       # don't double-pad tiny batches
        steps = max(steps, min_grid_steps)
    TB = _round_up(_cdiv(B, steps), 16)   # 16 sublanes = one packed bf16 vreg
    Bp = _round_up(B, TB)
    return TB, Bp


# ---------------------------------------------------------------------------
# pallas_call wrappers
# ---------------------------------------------------------------------------

def _call_resident(xp, w1p, b1p, w2p, b2p, *, TB, Bp, K, H, O, out_dtype,
                   single_buffer_weights):
    grid = (Bp // TB,)

    def weight_spec(shape):
        kwargs = {}
        if single_buffer_weights:
            # Constant index_map -> double-buffering buys nothing; single-buffer.
            kwargs["pipeline_mode"] = pl.Buffered(1)
        return pl.BlockSpec(shape, lambda i: (0, 0), **kwargs)

    x_item = jnp.dtype(xp.dtype).itemsize
    w_item = jnp.dtype(w1p.dtype).itemsize
    o_item = jnp.dtype(out_dtype).itemsize
    w_mult = 1 if single_buffer_weights else 2
    vmem_est = (2 * TB * K * x_item                 # x tiles (double-buffered)
                + 2 * TB * O * o_item               # out tiles (double-buffered)
                + w_mult * ((K * H + H * O) * w_item + (H + O) * 4))
    cap = int(0.9 * _vmem_capacity_bytes())
    vmem_bytes = max(16 << 20, min(int(vmem_est * 1.25) + (2 << 20), cap))

    return pl.pallas_call(
        _mlp_kernel,
        out_shape=jax.ShapeDtypeStruct((Bp, O), out_dtype),
        grid_spec=pltpu.PrefetchScalarGridSpec(
            num_scalar_prefetch=0,
            grid=grid,
            in_specs=[
                pl.BlockSpec((TB, K), lambda i: (i, 0)),   # activations (streamed)
                weight_spec((K, H)),                        # VMEM-resident weights
                weight_spec((1, H)),
                weight_spec((H, O)),
                weight_spec((1, O)),
            ],
            out_specs=pl.BlockSpec((TB, O), lambda i: (i, 0)),
        ),
        compiler_params=pltpu.CompilerParams(
            dimension_semantics=("parallel",),
            vmem_limit_bytes=vmem_bytes,
        ),
    )(xp, w1p, b1p, w2p, b2p)


def _pick_h_tile(K, H, O, budget_bytes, w_item):
    """Largest divisor of H (multiple of 128) whose double-buffered W1/W2
    blocks fit the given budget."""
    cands = [d for d in range(128, H + 1, 128) if H % d == 0]
    best = cands[0] if cands else H
    for d in sorted(cands, reverse=True):
        best = d
        if 2 * (K * d + d * O) * w_item <= budget_bytes:
            return d
    return best


def _call_htiled(xp, w1p, b1p, w2p, b2p, *, TB, Bp, K, H, O, out_dtype,
                 weight_budget):
    w_item = jnp.dtype(w1p.dtype).itemsize
    TH = _pick_h_tile(K, H, O, weight_budget, w_item)
    grid = (Bp // TB, H // TH)

    x_item = jnp.dtype(xp.dtype).itemsize
    o_item = jnp.dtype(out_dtype).itemsize
    vmem_est = (2 * TB * K * x_item
                + 2 * TB * O * o_item
                + TB * O * 4                              # f32 accumulator
                + 2 * (K * TH + TH * O) * w_item          # W1/W2 tiles (x2 bufs)
                + 2 * TH * 4 + 2 * O * 4)                 # bias tiles
    cap = int(0.9 * _vmem_capacity_bytes())
    vmem_bytes = max(16 << 20, min(int(vmem_est * 1.25) + (2 << 20), cap))

    return pl.pallas_call(
        _mlp_kernel_htiled,
        out_shape=jax.ShapeDtypeStruct((Bp, O), out_dtype),
        grid_spec=pltpu.PrefetchScalarGridSpec(
            num_scalar_prefetch=0,
            grid=grid,
            in_specs=[
                pl.BlockSpec((TB, K), lambda i, j: (i, 0)),
                pl.BlockSpec((K, TH), lambda i, j: (0, j)),
                pl.BlockSpec((1, TH), lambda i, j: (0, j)),
                pl.BlockSpec((TH, O), lambda i, j: (j, 0)),
                pl.BlockSpec((1, O), lambda i, j: (0, 0)),
            ],
            out_specs=pl.BlockSpec((TB, O), lambda i, j: (i, 0)),
            scratch_shapes=[pltpu.VMEM((TB, O), jnp.float32)],
        ),
        compiler_params=pltpu.CompilerParams(
            dimension_semantics=("parallel", "arbitrary"),
            vmem_limit_bytes=vmem_bytes,
        ),
    )(xp, w1p, b1p, w2p, b2p)


# ---------------------------------------------------------------------------
# Public forward
# ---------------------------------------------------------------------------

def my_fc_network(x, params, *, max_batch_tile=512, out_dtype=jnp.float32,
                  single_buffer_weights=True, weight_vmem_budget_bytes=None):
    """Forward pass of MyFCNetwork with pre-prepared (padded) parameters."""
    B, in_size = x.shape
    assert in_size == params["in_size"], (in_size, params["in_size"])
    K, H, O = params["K"], params["H"], params["O"]
    cdt = params["compute_dtype"]
    w1p, b1p, w2p, b2p = params["w1"], params["b1"], params["w2"], params["b2"]

    TB, Bp = _choose_batch_tiling(B, max_batch_tile=max_batch_tile)

    # Conditional no-op padding of x: only copy when alignment requires it.
    if in_size != K or B != Bp:
        xp = jnp.zeros((Bp, K), cdt).at[:B, :in_size].set(x.astype(cdt))
    else:
        xp = x  # streams straight from HBM; cast to bf16 inside the kernel

    w_item = jnp.dtype(cdt).itemsize
    weight_bytes = (K * H + H * O) * w_item + (H + O) * 4
    if weight_vmem_budget_bytes is None:
        weight_vmem_budget_bytes = int(0.45 * _vmem_capacity_bytes())
    use_h_tiling = weight_bytes > weight_vmem_budget_bytes

    if not use_h_tiling:
        call = functools.partial(_call_resident, xp, w1p, b1p, w2p, b2p,
                                 TB=TB, Bp=Bp, K=K, H=H, O=O,
                                 out_dtype=out_dtype)
        if single_buffer_weights:
            try:
                out_padded = call(single_buffer_weights=True)
            except Exception:
                # pl.Buffered(1) unsupported on this jax build -> default depth.
                out_padded = call(single_buffer_weights=False)
        else:
            out_padded = call(single_buffer_weights=False)
    else:
        out_padded = _call_htiled(xp, w1p, b1p, w2p, b2p,
                                  TB=TB, Bp=Bp, K=K, H=H, O=O,
                                  out_dtype=out_dtype,
                                  weight_budget=weight_vmem_budget_bytes)

    out = out_padded
    if B != Bp or params["out_size"] != O:
        out = out[:B, :params["out_size"]]
    return out.astype(x.dtype)


def my_fc_network_raw(x, w1, b1, w2, b2, **kwargs):
    """Convenience one-shot API (pads weights per call; prefer prepare+forward)."""
    return my_fc_network(x, prepare_mlp_params(w1, b1, w2, b2), **kwargs)


def _init_linear(key, in_features, out_features):
    """nn.Linear-style init; weight returned pre-transposed to (in, out)."""
    kw, kb = jax.random.split(key)
    bound = 1.0 / jnp.sqrt(jnp.float32(in_features))
    w = jax.random.uniform(kw, (in_features, out_features), jnp.float32,
                           minval=-bound, maxval=bound)
    b = jax.random.uniform(kb, (out_features,), jnp.float32,
                           minval=-bound, maxval=bound)
    return w, b


if __name__ == "__main__":
    batch, input_size, hidden_size, output_size = 8, 32, 32, 16

    key = jax.random.PRNGKey(0)
    kx, k1, k2 = jax.random.split(key, 3)

    x = jax.random.normal(kx, (batch, input_size), jnp.float32)
    w1, b1 = _init_linear(k1, input_size, hidden_size)
    w2, b2 = _init_linear(k2, hidden_size, output_size)

    # Weight padding / bf16 cast hoisted out of the forward: done once here.
    params = prepare_mlp_params(w1, b1, w2, b2)

    # Pure-JAX reference (same math as the PyTorch module). Tolerance reflects
    # the intentional bf16 MXU inputs (f32 accumulation / bias / sigmoid).
    ref = jax.nn.sigmoid(x @ w1 + b1) @ w2 + b2

    # Path 1: VMEM-resident weights (default).
    out = jax.block_until_ready(my_fc_network(x, params))
    assert out.shape == (batch, output_size)
    assert jnp.allclose(out, ref, atol=5e-2, rtol=5e-2), (
        float(jnp.max(jnp.abs(out - ref))))

    # Path 2: hidden-dim-tiled fallback (used automatically when weights are
    # too large for VMEM, e.g. on v7x); forced here to exercise/verify it.
    out2 = jax.block_until_ready(
        my_fc_network(x, params, weight_vmem_budget_bytes=0))
    assert out2.shape == (batch, output_size)
    assert jnp.allclose(out2, ref, atol=5e-2, rtol=5e-2), (
        float(jnp.max(jnp.abs(out2 - ref))))

    print("KERNEL_OK")
</pallas_src>

<mosaic_0001>
module attributes {stable_mosaic.version = 11 : i64} {
  func.func @_mlp_kernel(%arg0: i32, %arg1: memref<16x128xbf16, #tpu.memory_space<vmem>>, %arg2: memref<128x256xbf16, #tpu.memory_space<vmem>>, %arg3: memref<1x256xf32, #tpu.memory_space<vmem>>, %arg4: memref<256x256xbf16, #tpu.memory_space<vmem>>, %arg5: memref<1x256xf32, #tpu.memory_space<vmem>>, %arg6: memref<16x256xf32, #tpu.memory_space<vmem>>) attributes {dimension_semantics = [#tpu.dimension_semantics<parallel>], iteration_bounds = array<i64: 1>, scalar_prefetch = 0 : i64, scratch_operands = 0 : i64, tpu.core_type = #tpu.core_type<tc>, window_params = [{transform_indices = @transform_0, window_bounds = array<i64: 16, 128>}, {pipeline_mode = #tpu.pipeline_mode<synchronous>, transform_indices = @transform_1, window_bounds = array<i64: 128, 256>}, {pipeline_mode = #tpu.pipeline_mode<synchronous>, transform_indices = @transform_2, window_bounds = array<i64: 1, 256>}, {pipeline_mode = #tpu.pipeline_mode<synchronous>, transform_indices = @transform_3, window_bounds = array<i64: 256, 256>}, {pipeline_mode = #tpu.pipeline_mode<synchronous>, transform_indices = @transform_4, window_bounds = array<i64: 1, 256>}, {transform_indices = @transform_5, window_bounds = array<i64: 16, 256>}]} {
    %c0 = arith.constant 0 : index
    %c0_0 = arith.constant 0 : index
    %0 = vector.load %arg1[%c0, %c0_0] : memref<16x128xbf16, #tpu.memory_space<vmem>>, vector<16x128xbf16>
    %c0_1 = arith.constant 0 : index
    %c0_2 = arith.constant 0 : index
    %1 = vector.load %arg2[%c0_1, %c0_2] : memref<128x256xbf16, #tpu.memory_space<vmem>>, vector<128x256xbf16>
    %cst = arith.constant dense<0.000000e+00> : vector<16x256xf32>
    %2 = tpu.matmul %0, %1, %cst {dimension_numbers = #tpu.dot_dimension_numbers<[1], [0], [0], [1], [0, 0, 1, 1], [], []>} : vector<16x128xbf16>, vector<128x256xbf16>, vector<16x256xf32> -> vector<16x256xf32>
    %c0_3 = arith.constant 0 : index
    %c0_4 = arith.constant 0 : index
    %3 = vector.load %arg3[%c0_3, %c0_4] : memref<1x256xf32, #tpu.memory_space<vmem>>, vector<1x256xf32>
    %4 = vector.broadcast %3 : vector<1x256xf32> to vector<16x256xf32>
    %5 = arith.addf %2, %4 : vector<16x256xf32>
    %6 = arith.negf %5 : vector<16x256xf32>
    %7 = math.exp %6 : vector<16x256xf32>
    %cst_5 = arith.constant 1.000000e+00 : f32
    %8 = vector.broadcast %cst_5 : f32 to vector<16x256xf32>
    %9 = arith.addf %8, %7 : vector<16x256xf32>
    %10 = arith.divf %8, %9 : vector<16x256xf32>
    %11 = arith.truncf %10 : vector<16x256xf32> to vector<16x256xbf16>
    %c0_6 = arith.constant 0 : index
    %c0_7 = arith.constant 0 : index
    %12 = vector.load %arg4[%c0_6, %c0_7] : memref<256x256xbf16, #tpu.memory_space<vmem>>, vector<256x256xbf16>
    %cst_8 = arith.constant dense<0.000000e+00> : vector<16x256xf32>
    %13 = tpu.matmul %11, %12, %cst_8 {dimension_numbers = #tpu.dot_dimension_numbers<[1], [0], [0], [1], [0, 0, 1, 1], [], []>} : vector<16x256xbf16>, vector<256x256xbf16>, vector<16x256xf32> -> vector<16x256xf32>
    %c0_9 = arith.constant 0 : index
    %c0_10 = arith.constant 0 : index
    %14 = vector.load %arg5[%c0_9, %c0_10] : memref<1x256xf32, #tpu.memory_space<vmem>>, vector<1x256xf32>
    %15 = vector.broadcast %14 : vector<1x256xf32> to vector<16x256xf32>
    %16 = arith.addf %13, %15 : vector<16x256xf32>
    %c0_11 = arith.constant 0 : index
    %c0_12 = arith.constant 0 : index
    %17 = vector.load %arg6[%c0_11, %c0_12] : memref<16x256xf32, #tpu.memory_space<vmem>>, vector<16x256xf32>
    tpu.vector_store %arg6[%c0_11, %c0_12], %16 {strides = array<i32>} : memref<16x256xf32, #tpu.memory_space<vmem>>, vector<16x256xf32>,
    return
  }
  func.func @transform_0(%arg0: i32) -> (i32, i32) {
    %c0_i32 = arith.constant 0 : i32
    %c0_i32_0 = arith.constant 0 : i32
    return %arg0, %c0_i32 : i32, i32
  }
  func.func @transform_1(%arg0: i32) -> (i32, i32) {
    %c0_i32 = arith.constant 0 : i32
    %c0_i32_0 = arith.constant 0 : i32
    %c0_i32_1 = arith.constant 0 : i32
    return %c0_i32, %c0_i32_0 : i32, i32
  }
  func.func @transform_2(%arg0: i32) -> (i32, i32) {
    %c0_i32 = arith.constant 0 : i32
    %c0_i32_0 = arith.constant 0 : i32
    %c0_i32_1 = arith.constant 0 : i32
    return %c0_i32, %c0_i32_0 : i32, i32
  }
  func.func @transform_3(%arg0: i32) -> (i32, i32) {
    %c0_i32 = arith.constant 0 : i32
    %c0_i32_0 = arith.constant 0 : i32
    %c0_i32_1 = arith.constant 0 : i32
    return %c0_i32, %c0_i32_0 : i32, i32
  }
  func.func @transform_4(%arg0: i32) -> (i32, i32) {
    %c0_i32 = arith.constant 0 : i32
    %c0_i32_0 = arith.constant 0 : i32
    %c0_i32_1 = arith.constant 0 : i32
    return %c0_i32, %c0_i32_0 : i32, i32
  }
  func.func @transform_5(%arg0: i32) -> (i32, i32) {
    %c0_i32 = arith.constant 0 : i32
    %c0_i32_0 = arith.constant 0 : i32
    return %arg0, %c0_i32 : i32, i32
  }
}

module attributes {stable_mosaic.version = 11 : i64} {
  func.func @_mlp_kernel(%arg0: i32, %arg1: memref<16x128xbf16, #tpu.memory_space<vmem>>, %arg2: memref<128x256xbf16, #tpu.memory_space<vmem>>, %arg3: memref<1x256xf32, #tpu.memory_space<vmem>>, %arg4: memref<256x256xbf16, #tpu.memory_space<vmem>>, %arg5: memref<1x256xf32, #tpu.memory_space<vmem>>, %arg6: memref<16x256xf32, #tpu.memory_space<vmem>>) attributes {dimension_semantics = [#tpu.dimension_semantics<parallel>], iteration_bounds = array<i64: 1>, scalar_prefetch = 0 : i64, scratch_operands = 0 : i64, tpu.core_type = #tpu.core_type<tc>, window_params = [{transform_indices = @transform_0, window_bounds = array<i64: 16, 128>}, {pipeline_mode = #tpu.pipeline_mode<synchronous>, transform_indices = @transform_1, window_bounds = array<i64: 128, 256>}, {pipeline_mode = #tpu.pipeline_mode<synchronous>, transform_indices = @transform_2, window_bounds = array<i64: 1, 256>}, {pipeline_mode = #tpu.pipeline_mode<synchronous>, transform_indices = @transform_3, window_bounds = array<i64: 256, 256>}, {pipeline_mode = #tpu.pipeline_mode<synchronous>, transform_indices = @transform_4, window_bounds = array<i64: 1, 256>}, {transform_indices = @transform_5, window_bounds = array<i64: 16, 256>}]} {
    %c0 = arith.constant 0 : index
    %c0_0 = arith.constant 0 : index
    %0 = vector.load %arg1[%c0, %c0_0] : memref<16x128xbf16, #tpu.memory_space<vmem>>, vector<16x128xbf16>
    %c0_1 = arith.constant 0 : index
    %c0_2 = arith.constant 0 : index
    %1 = vector.load %arg2[%c0_1, %c0_2] : memref<128x256xbf16, #tpu.memory_space<vmem>>, vector<128x256xbf16>
    %cst = arith.constant dense<0.000000e+00> : vector<16x256xf32>
    %2 = tpu.matmul %0, %1, %cst {dimension_numbers = #tpu.dot_dimension_numbers<[1], [0], [0], [1], [0, 0, 1, 1], [], []>} : vector<16x128xbf16>, vector<128x256xbf16>, vector<16x256xf32> -> vector<16x256xf32>
    %c0_3 = arith.constant 0 : index
    %c0_4 = arith.constant 0 : index
    %3 = vector.load %arg3[%c0_3, %c0_4] : memref<1x256xf32, #tpu.memory_space<vmem>>, vector<1x256xf32>
    %4 = vector.broadcast %3 : vector<1x256xf32> to vector<16x256xf32>
    %5 = arith.addf %2, %4 : vector<16x256xf32>
    %6 = arith.negf %5 : vector<16x256xf32>
    %7 = math.exp %6 : vector<16x256xf32>
    %cst_5 = arith.constant 1.000000e+00 : f32
    %8 = vector.broadcast %cst_5 : f32 to vector<16x256xf32>
    %9 = arith.addf %8, %7 : vector<16x256xf32>
    %10 = arith.divf %8, %9 : vector<16x256xf32>
    %11 = arith.truncf %10 : vector<16x256xf32> to vector<16x256xbf16>
    %c0_6 = arith.constant 0 : index
    %c0_7 = arith.constant 0 : index
    %12 = vector.load %arg4[%c0_6, %c0_7] : memref<256x256xbf16, #tpu.memory_space<vmem>>, vector<256x256xbf16>
    %cst_8 = arith.constant dense<0.000000e+00> : vector<16x256xf32>
    %13 = tpu.matmul %11, %12, %cst_8 {dimension_numbers = #tpu.dot_dimension_numbers<[1], [0], [0], [1], [0, 0, 1, 1], [], []>} : vector<16x256xbf16>, vector<256x256xbf16>, vector<16x256xf32> -> vector<16x256xf32>
    %c0_9 = arith.constant 0 : index
    %c0_10 = arith.constant 0 : index
    %14 = vector.load %arg5[%c0_9, %c0_10] : memref<1x256xf32, #tpu.memory_space<vmem>>, vector<1x256xf32>
    %15 = vector.broadcast %14 : vector<1x256xf32> to vector<16x256xf32>
    %16 = arith.addf %13, %15 : vector<16x256xf32>
    %c0_11 = arith.constant 0 : index
    %c0_12 = arith.constant 0 : index
    %17 = vector.load %arg6[%c0_11, %c0_12] : memref<16x256xf32, #tpu.memory_space<vmem>>, vector<16x256xf32>
    tpu.vector_store %arg6[%c0_11, %c0_12], %16 {strides = array<i32>} : memref<16x256xf32, #tpu.memory_space<vmem>>, vector<16x256xf32>,
    return
  }
  func.func @transform_0(%arg0: i32) -> (i32, i32) {
    %c0_i32 = arith.constant 0 : i32
    %c0_i32_0 = arith.constant 0 : i32
    return %arg0, %c0_i32 : i32, i32
  }
  func.func @transform_1(%arg0: i32) -> (i32, i32) {
    %c0_i32 = arith.constant 0 : i32
    %c0_i32_0 = arith.constant 0 : i32
    %c0_i32_1 = arith.constant 0 : i32
    return %c0_i32, %c0_i32_0 : i32, i32
  }
  func.func @transform_2(%arg0: i32) -> (i32, i32) {
    %c0_i32 = arith.constant 0 : i32
    %c0_i32_0 = arith.constant 0 : i32
    %c0_i32_1 = arith.constant 0 : i32
    return %c0_i32, %c0_i32_0 : i32, i32
  }
  func.func @transform_3(%arg0: i32) -> (i32, i32) {
    %c0_i32 = arith.constant 0 : i32
    %c0_i32_0 = arith.constant 0 : i32
    %c0_i32_1 = arith.constant 0 : i32
    return %c0_i32, %c0_i32_0 : i32, i32
  }
  func.func @transform_4(%arg0: i32) -> (i32, i32) {
    %c0_i32 = arith.constant 0 : i32
    %c0_i32_0 = arith.constant 0 : i32
    %c0_i32_1 = arith.constant 0 : i32
    return %c0_i32, %c0_i32_0 : i32, i32
  }
  func.func @transform_5(%arg0: i32) -> (i32, i32) {
    %c0_i32 = arith.constant 0 : i32
    %c0_i32_0 = arith.constant 0 : i32
    return %arg0, %c0_i32 : i32, i32
  }
}

</mosaic_0001>

<llo_original>
// kernel: tpu_custom_call.1
$region0: #{tpu_custom_call.1}
  #allocation0 [shape = 'u32[]', space=smem, size = 0x4, offset = 0x4, fixed_abs, tag = 'smem constant byte address 0x4 - core index']
  #allocation1 [shape = 'u32[144,128]{1,0:T(1,128)}', space=vmem, size = 0x12000, scoped, tag = 'internal scratch']
  %s0 = inlined_call_operand.hbm [shape: bf16[16,128], index: 0, kind: input, shape index: {}]
  %s1 = inlined_call_operand.hbm [shape: bf16[128,256], index: 1, kind: input, shape index: {}]
  %s2 = inlined_call_operand.vmem [shape: f32[1,256], index: 2, kind: input, shape index: {}]
  %s3 = inlined_call_operand.hbm [shape: bf16[256,256], index: 3, kind: input, shape index: {}]
  %s4 = inlined_call_operand.vmem [shape: f32[1,256], index: 4, kind: input, shape index: {}]
  %s5 = inlined_call_operand.hbm [shape: f32[16,256], index: 5, kind: output, shape index: {}]
  %s6 = sld [smem:[#allocation0]]
  $region42: #{tpu_custom_call.1} parent=0
    _
  %s8 = ssub.s32 1, %s6
  %s9 = scalar_select 0, %s8, %s6
  $region1: #{tpu_custom_call.1} parent=0
    #allocation2 [shape = 'u8[4096]{0}', space=vmem, size = 0x1000, scoped, tag = 'input window, operand 0, single buffered']
    #allocation3 [shape = 's32[1]{0}', space=sflag, size = 0x4, scoped, tag = 'scoped memory for tpu_custom_call.1']
    #allocation4 [shape = 's32[1]{0}', space=sflag, size = 0x4, scoped, tag = 'scoped memory for tpu_custom_call.1']
    #allocation5 [shape = 'u8[65536]{0}', space=vmem, size = 0x10000, scoped, tag = 'input window, operand 1, single buffered']
    #allocation6 [shape = 's32[1]{0}', space=sflag, size = 0x4, scoped, tag = 'scoped memory for tpu_custom_call.1']
    #allocation7 [shape = 'u8[131072]{0}', space=vmem, size = 0x20000, scoped, tag = 'input window, operand 3, single buffered']
    #allocation8 [shape = 'u8[16384]{0}', space=vmem, size = 0x4000, scoped, tag = 'output window, operand 0, single buffered']
    %10 = vsyncpa [#allocation3], 0
    %11 = vsyncpa [#allocation6], 0
    %12 = vsyncpa [#allocation4], 0
    // Predicated region
    $region2: #{tpu_custom_call.1} parent=1 // pred_check
      _
    $region3: #{tpu_custom_call.1} parent=1 // pred_check_branch
      %14 = sbr.rel (0) target = $region5
    $region4: #{tpu_custom_call.1} parent=1 // pred_region
      %s16 = ssub.s32 128, 128
      %17 = vsyncadd [#allocation3], %s16
      %s18 = sshll.u32 [#allocation2], 4
      %s19 = int_to_ptr.vmem [resolvable:$true] %s18
      %24 = dma.hbm_to_vmem [thread:$0]  %s0, 128, %s19, [#allocation3], 64, 64, 4
    $region5: #{tpu_custom_call.1} parent=1 // pred_fallthru
      _
    // Predicated region
    $region6: #{tpu_custom_call.1} parent=1 // pred_check
      _
    $region7: #{tpu_custom_call.1} parent=1 // pred_check_branch
      %26 = sbr.rel (0) target = $region9
    $region8: #{tpu_custom_call.1} parent=1 // pred_region
      %s28 = ssub.s32 2048, 2048
      %29 = vsyncadd [#allocation6], %s28
      %s30 = sshll.u32 [#allocation5], 4
      %s31 = int_to_ptr.vmem [resolvable:$true] %s30
      %36 = dma.hbm_to_vmem [thread:$0]  %s1, 2048, %s31, [#allocation6], 128, 128, 8
    $region9: #{tpu_custom_call.1} parent=1 // pred_fallthru
      _
    // Predicated region
    $region10: #{tpu_custom_call.1} parent=1 // pred_check
      _
    $region11: #{tpu_custom_call.1} parent=1 // pred_check_branch
      %38 = sbr.rel (0) target = $region13
    $region12: #{tpu_custom_call.1} parent=1 // pred_region
      _
    $region13: #{tpu_custom_call.1} parent=1 // pred_fallthru
      _
    // Predicated region
    $region14: #{tpu_custom_call.1} parent=1 // pred_check
      _
    $region15: #{tpu_custom_call.1} parent=1 // pred_check_branch
      %40 = sbr.rel (0) target = $region17
    $region16: #{tpu_custom_call.1} parent=1 // pred_region
      %s42 = ssub.s32 4096, 4096
      %43 = vsyncadd [#allocation6], %s42
      %s44 = sshll.u32 [#allocation7], 4
      %s45 = int_to_ptr.vmem [resolvable:$true] %s44
      %50 = dma.hbm_to_vmem [thread:$0]  %s3, 4096, %s45, [#allocation6], 128, 128, 8
    $region17: #{tpu_custom_call.1} parent=1 // pred_fallthru
      _
    // Predicated region
    $region18: #{tpu_custom_call.1} parent=1 // pred_check
      _
    $region19: #{tpu_custom_call.1} parent=1 // pred_check_branch
      %52 = sbr.rel (0) target = $region21
    $region20: #{tpu_custom_call.1} parent=1 // pred_region
      _
    $region21: #{tpu_custom_call.1} parent=1 // pred_fallthru
      _
    // Predicated region
    $region22: #{tpu_custom_call.1} parent=1 // pred_check
      _
    $region23: #{tpu_custom_call.1} parent=1 // pred_check_branch
      %54 = sbr.rel (0) target = $region25
    $region24: #{tpu_custom_call.1} parent=1 // pred_region
      %55 = dma.done [#allocation3], 128
    $region25: #{tpu_custom_call.1} parent=1 // pred_fallthru
      _
    // Predicated region
    $region26: #{tpu_custom_call.1} parent=1 // pred_check
      _
    $region27: #{tpu_custom_call.1} parent=1 // pred_check_branch
      %57 = sbr.rel (0) target = $region29
    $region28: #{tpu_custom_call.1} parent=1 // pred_region
      %58 = dma.done [#allocation6], 2048
    $region29: #{tpu_custom_call.1} parent=1 // pred_fallthru
      _
    // Predicated region
    $region30: #{tpu_custom_call.1} parent=1 // pred_check
      _
    $region31: #{tpu_custom_call.1} parent=1 // pred_check_branch
      %60 = sbr.rel (0) target = $region33
    $region32: #{tpu_custom_call.1} parent=1 // pred_region
      %61 = dma.done [#allocation6], 4096
    $region33: #{tpu_custom_call.1} parent=1 // pred_fallthru
      _
    %v63 = vld [vmem:[#allocation2] sm:$0xf]
    %v64 = vld [vmem:[#allocation2 + $0x4] sm:$0xf]
    %v65 = vld [vmem:[#allocation5] sm:$0xff]
    %v66 = vld [vmem:[#allocation5 + $0x8] sm:$0xff]
    %v67 = vld [vmem:[#allocation5 + $0x10] sm:$0xff]
    %v68 = vld [vmem:[#allocation5 + $0x18] sm:$0xff]
    %v69 = vld [vmem:[#allocation5 + $0x20] sm:$0xff]
    %v70 = vld [vmem:[#allocation5 + $0x28] sm:$0xff]
    %v71 = vld [vmem:[#allocation5 + $0x30] sm:$0xff]
    %v72 = vld [vmem:[#allocation5 + $0x38] sm:$0xff]
    %v73 = vld [vmem:[#allocation5 + $0x40] sm:$0xff]
    %v74 = vld [vmem:[#allocation5 + $0x48] sm:$0xff]
    %v75 = vld [vmem:[#allocation5 + $0x50] sm:$0xff]
    %v76 = vld [vmem:[#allocation5 + $0x58] sm:$0xff]
    %v77 = vld [vmem:[#allocation5 + $0x60] sm:$0xff]
    %v78 = vld [vmem:[#allocation5 + $0x68] sm:$0xff]
    %v79 = vld [vmem:[#allocation5 + $0x70] sm:$0xff]
    %v80 = vld [vmem:[#allocation5 + $0x78] sm:$0xff]
    %v81 = vld [vmem:[%s2] sm:$0x3]
    %v83 = vlaneseq
    %v84 = vshrl.u32 %v83, 7
    %v85 = vsub.s32 0, %v84
    %v86 = vrot.slane %v81, %v85
    %v87 = vlaneseq
    %v88 = vshrl.u32 %v87, 7
    %v89 = vsub.s32 1, %v88
    %v90 = vrot.slane %v81, %v89
    %v95 = vunpack.c.l.b16 %v63
    %v96 = vunpack.c.l.b16 %v64
    %v97 = vpack.c.b16 %v96, %v95
    %v115 = vunpack.c.l.b16 %v65
    %v116 = vunpack.c.h.b16 %v65
    %v117 = vunpack.c.l.b16 %v66
    %v118 = vunpack.c.h.b16 %v66
    %v119 = vunpack.c.l.b16 %v67
    %v120 = vunpack.c.h.b16 %v67
    %v121 = vunpack.c.l.b16 %v68
    %v122 = vunpack.c.h.b16 %v68
    %v123 = vunpack.c.l.b16 %v69
    %v124 = vunpack.c.h.b16 %v69
    %v125 = vunpack.c.l.b16 %v70
    %v126 = vunpack.c.h.b16 %v70
    %v127 = vunpack.c.l.b16 %v71
    %v128 = vunpack.c.h.b16 %v71
    %v129 = vunpack.c.l.b16 %v72
    %v130 = vunpack.c.h.b16 %v72
    %v131 = vunpack.c.l.b16 %v73
    %v132 = vunpack.c.h.b16 %v73
    %v133 = vunpack.c.l.b16 %v74
    %v134 = vunpack.c.h.b16 %v74
    %v135 = vunpack.c.l.b16 %v75
    %v136 = vunpack.c.h.b16 %v75
    %v137 = vunpack.c.l.b16 %v76
    %v138 = vunpack.c.h.b16 %v76
    %v139 = vunpack.c.l.b16 %v77
    %v140 = vunpack.c.h.b16 %v77
    %v141 = vunpack.c.l.b16 %v78
    %v142 = vunpack.c.h.b16 %v78
    %v143 = vunpack.c.l.b16 %v79
    %v144 = vunpack.c.h.b16 %v79
    %v145 = vunpack.c.l.b16 %v80
    %v146 = vunpack.c.h.b16 %v80
    %v147 = vpack.c.b16 %v117, %v115
    %v148 = vpack.c.b16 %v118, %v116
    %v149 = vpack.c.b16 %v121, %v119
    %v150 = vpack.c.b16 %v122, %v120
    %v151 = vpack.c.b16 %v125, %v123
    %v152 = vpack.c.b16 %v126, %v124
    %v153 = vpack.c.b16 %v129, %v127
    %v154 = vpack.c.b16 %v130, %v128
    %v155 = vpack.c.b16 %v133, %v131
    %v156 = vpack.c.b16 %v134, %v132
    %v157 = vpack.c.b16 %v137, %v135
    %v158 = vpack.c.b16 %v138, %v136
    %v159 = vpack.c.b16 %v141, %v139
    %v160 = vpack.c.b16 %v142, %v140
    %v161 = vpack.c.b16 %v145, %v143
    %v162 = vpack.c.b16 %v146, %v144
    %179 = vmatprep.subr.bf16.mxu0 %v148
    %180 = vmatpush1.bf16.msra.mxu0 %v147
    %181 = vmatprep.subr.bf16.mxu0 %v150
    %182 = vmatpush1.bf16.msra.mxu0 %v149
    %183 = vmatprep.subr.bf16.mxu0 %v152
    %184 = vmatpush1.bf16.msra.mxu0 %v151
    %185 = vmatprep.subr.bf16.mxu0 %v154
    %186 = vmatpush1.bf16.msra.mxu0 %v153
    %187 = vmatprep.subr.bf16.mxu0 %v156
    %188 = vmatpush1.bf16.msra.mxu0 %v155
    %189 = vmatprep.subr.bf16.mxu0 %v158
    %190 = vmatpush1.bf16.msra.mxu0 %v157
    %191 = vmatprep.subr.bf16.mxu0 %v160
    %192 = vmatpush1.bf16.msra.mxu0 %v159
    %193 = vmatprep.subr.bf16.mxu0 %v162
    %194 = vmatpush1.bf16.msra.mxu0 %v161
    %195 = vmatprep.subr.bf16.mxu0 0
    %196 = vmatpush1.bf16.msra.mxu0 0
    %197 = vmatprep.subr.bf16.mxu0 0
    %198 = vmatpush1.bf16.msra.mxu0 0
    %199 = vmatprep.subr.bf16.mxu0 0
    %200 = vmatpush1.bf16.msra.mxu0 0
    %201 = vmatprep.subr.bf16.mxu0 0
    %202 = vmatpush1.bf16.msra.mxu0 0
    %203 = vmatprep.subr.bf16.mxu0 0
    %204 = vmatpush1.bf16.msra.mxu0 0
    %205 = vmatprep.subr.bf16.mxu0 0
    %206 = vmatpush1.bf16.msra.mxu0 0
    %207 = vmatprep.subr.bf16.mxu0 0
    %208 = vmatpush1.bf16.msra.mxu0 0
    %209 = vmatprep.subr.bf16.mxu0 0
    %210 = vmatpush1.bf16.msra.mxu0 0
    %211 = vmatprep.mubr.bf16.mxu0 0
    %212 = vmatmul.mubr.bf16.gmra.mrb[0].mxu0 %v97
    %v213 = vpop.f32.mrb[0].mxu0
    %v214 = vadd.f32 %v86, %v213
    %v215 = vpop.f32.mrb[0].mxu0
    %v216 = vadd.f32 %v90, %v215
    %v217 = vpop.f32.mrb[0].mxu0
    %v218 = vadd.f32 %v86, %v217
    %v219 = vpop.f32.mrb[0].mxu0
    %v220 = vadd.f32 %v90, %v219
    %221 = vdwg.mxu0
    %v222 = vxor.u32 %v214, 2147483648
    %v223 = vxor.u32 %v216, 2147483648
    %v224 = vxor.u32 %v218, 2147483648
    %v225 = vxor.u32 %v220, 2147483648
    %v226 = vmul.f32 %v222, 1.442695
    %v227 = vpow.pop %v226
    %v228 = vmul.f32 %v223, 1.442695
    %v229 = vpow.pop %v228
    %v230 = vmul.f32 %v224, 1.442695
    %v231 = vpow.pop %v230
    %v232 = vmul.f32 %v225, 1.442695
    %v233 = vpow.pop %v232
    %v234 = vadd.f32 %v227, 1.0
    %v235 = vadd.f32 %v229, 1.0
    %v236 = vadd.f32 %v231, 1.0
    %v237 = vadd.f32 %v233, 1.0
    %v238 = vrcp.pop %v234
    %v239 = vmul.f32 1.0, %v238
    %v240 = vrcp.pop %v235
    %v241 = vmul.f32 1.0, %v240
    %v242 = vrcp.pop %v236
    %v243 = vmul.f32 1.0, %v242
    %v244 = vrcp.pop %v237
    %v245 = vmul.f32 1.0, %v244
    %v246 = vpack.c.bf16 %v243, %v239
    %v247 = vpack.c.bf16 %v245, %v241
    %v248 = vld [vmem:[#allocation7] sm:$0xff]
    %v249 = vld [vmem:[#allocation7 + $0x8] sm:$0xff]
    %v250 = vld [vmem:[#allocation7 + $0x10] sm:$0xff]
    %v251 = vld [vmem:[#allocation7 + $0x18] sm:$0xff]
    %v252 = vld [vmem:[#allocation7 + $0x20] sm:$0xff]
    %v253 = vld [vmem:[#allocation7 + $0x28] sm:$0xff]
    %v254 = vld [vmem:[#allocation7 + $0x30] sm:$0xff]
    %v255 = vld [vmem:[#allocation7 + $0x38] sm:$0xff]
    %v256 = vld [vmem:[#allocation7 + $0x40] sm:$0xff]
    %v257 = vld [vmem:[#allocation7 + $0x48] sm:$0xff]
    %v258 = vld [vmem:[#allocation7 + $0x50] sm:$0xff]
    %v259 = vld [vmem:[#allocation7 + $0x58] sm:$0xff]
    %v260 = vld [vmem:[#allocation7 + $0x60] sm:$0xff]
    %v261 = vld [vmem:[#allocation7 + $0x68] sm:$0xff]
    %v262 = vld [vmem:[#allocation7 + $0x70] sm:$0xff]
    %v263 = vld [vmem:[#allocation7 + $0x78] sm:$0xff]
    %v264 = vld [vmem:[#allocation7 + $0x80] sm:$0xff]
    %v265 = vld [vmem:[#allocation7 + $0x88] sm:$0xff]
    %v266 = vld [vmem:[#allocation7 + $0x90] sm:$0xff]
    %v267 = vld [vmem:[#allocation7 + $0x98] sm:$0xff]
    %v268 = vld [vmem:[#allocation7 + $0xa0] sm:$0xff]
    %v269 = vld [vmem:[#allocation7 + $0xa8] sm:$0xff]
    %v270 = vld [vmem:[#allocation7 + $0xb0] sm:$0xff]
    %v271 = vld [vmem:[#allocation7 + $0xb8] sm:$0xff]
    %v272 = vld [vmem:[#allocation7 + $0xc0] sm:$0xff]
    %v273 = vld [vmem:[#allocation7 + $0xc8] sm:$0xff]
    %v274 = vld [vmem:[#allocation7 + $0xd0] sm:$0xff]
    %v275 = vld [vmem:[#allocation7 + $0xd8] sm:$0xff]
    %v276 = vld [vmem:[#allocation7 + $0xe0] sm:$0xff]
    %v277 = vld [vmem:[#allocation7 + $0xe8] sm:$0xff]
    %v278 = vld [vmem:[#allocation7 + $0xf0] sm:$0xff]
    %v279 = vld [vmem:[#allocation7 + $0xf8] sm:$0xff]
    %v280 = vld [vmem:[%s4] sm:$0x3]
    %v282 = vlaneseq
    %v283 = vshrl.u32 %v282, 7
    %v284 = vsub.s32 0, %v283
    %v285 = vrot.slane %v280, %v284
    %v286 = vlaneseq
    %v287 = vshrl.u32 %v286, 7
    %v288 = vsub.s32 1, %v287
    %v289 = vrot.slane %v280, %v288
    %v324 = vunpack.c.l.b16 %v248
    %v325 = vunpack.c.h.b16 %v248
    %v326 = vunpack.c.l.b16 %v249
    %v327 = vunpack.c.h.b16 %v249
    %v328 = vunpack.c.l.b16 %v250
    %v329 = vunpack.c.h.b16 %v250
    %v330 = vunpack.c.l.b16 %v251
    %v331 = vunpack.c.h.b16 %v251
    %v332 = vunpack.c.l.b16 %v252
    %v333 = vunpack.c.h.b16 %v252
    %v334 = vunpack.c.l.b16 %v253
    %v335 = vunpack.c.h.b16 %v253
    %v336 = vunpack.c.l.b16 %v254
    %v337 = vunpack.c.h.b16 %v254
    %v338 = vunpack.c.l.b16 %v255
    %v339 = vunpack.c.h.b16 %v255
    %v340 = vunpack.c.l.b16 %v256
    %v341 = vunpack.c.h.b16 %v256
    %v342 = vunpack.c.l.b16 %v257
    %v343 = vunpack.c.h.b16 %v257
    %v344 = vunpack.c.l.b16 %v258
    %v345 = vunpack.c.h.b16 %v258
    %v346 = vunpack.c.l.b16 %v259
    %v347 = vunpack.c.h.b16 %v259
    %v348 = vunpack.c.l.b16 %v260
    %v349 = vunpack.c.h.b16 %v260
    %v350 = vunpack.c.l.b16 %v261
    %v351 = vunpack.c.h.b16 %v261
    %v352 = vunpack.c.l.b16 %v262
    %v353 = vunpack.c.h.b16 %v262
    %v354 = vunpack.c.l.b16 %v263
    %v355 = vunpack.c.h.b16 %v263
    %v356 = vunpack.c.l.b16 %v264
    %v357 = vunpack.c.h.b16 %v264
    %v358 = vunpack.c.l.b16 %v265
    %v359 = vunpack.c.h.b16 %v265
    %v360 = vunpack.c.l.b16 %v266
    %v361 = vunpack.c.h.b16 %v266
    %v362 = vunpack.c.l.b16 %v267
    %v363 = vunpack.c.h.b16 %v267
    %v364 = vunpack.c.l.b16 %v268
    %v365 = vunpack.c.h.b16 %v268
    %v366 = vunpack.c.l.b16 %v269
    %v367 = vunpack.c.h.b16 %v269
    %v368 = vunpack.c.l.b16 %v270
    %v369 = vunpack.c.h.b16 %v270
    %v370 = vunpack.c.l.b16 %v271
    %v371 = vunpack.c.h.b16 %v271
    %v372 = vunpack.c.l.b16 %v272
    %v373 = vunpack.c.h.b16 %v272
    %v374 = vunpack.c.l.b16 %v273
    %v375 = vunpack.c.h.b16 %v273
    %v376 = vunpack.c.l.b16 %v274
    %v377 = vunpack.c.h.b16 %v274
    %v378 = vunpack.c.l.b16 %v275
    %v379 = vunpack.c.h.b16 %v275
    %v380 = vunpack.c.l.b16 %v276
    %v381 = vunpack.c.h.b16 %v276
    %v382 = vunpack.c.l.b16 %v277
    %v383 = vunpack.c.h.b16 %v277
    %v384 = vunpack.c.l.b16 %v278
    %v385 = vunpack.c.h.b16 %v278
    %v386 = vunpack.c.l.b16 %v279
    %v387 = vunpack.c.h.b16 %v279
    %v388 = vpack.c.b16 %v326, %v324
    %v389 = vpack.c.b16 %v327, %v325
    %v390 = vpack.c.b16 %v330, %v328
    %v391 = vpack.c.b16 %v331, %v329
    %v392 = vpack.c.b16 %v334, %v332
    %v393 = vpack.c.b16 %v335, %v333
    %v394 = vpack.c.b16 %v338, %v336
    %v395 = vpack.c.b16 %v339, %v337
    %v396 = vpack.c.b16 %v342, %v340
    %v397 = vpack.c.b16 %v343, %v341
    %v398 = vpack.c.b16 %v346, %v344
    %v399 = vpack.c.b16 %v347, %v345
    %v400 = vpack.c.b16 %v350, %v348
    %v401 = vpack.c.b16 %v351, %v349
    %v402 = vpack.c.b16 %v354, %v352
    %v403 = vpack.c.b16 %v355, %v353
    %v404 = vpack.c.b16 %v358, %v356
    %v405 = vpack.c.b16 %v359, %v357
    %v406 = vpack.c.b16 %v362, %v360
    %v407 = vpack.c.b16 %v363, %v361
    %v408 = vpack.c.b16 %v366, %v364
    %v409 = vpack.c.b16 %v367, %v365
    %v410 = vpack.c.b16 %v370, %v368
    %v411 = vpack.c.b16 %v371, %v369
    %v412 = vpack.c.b16 %v374, %v372
    %v413 = vpack.c.b16 %v375, %v373
    %v414 = vpack.c.b16 %v378, %v376
    %v415 = vpack.c.b16 %v379, %v377
    %v416 = vpack.c.b16 %v382, %v380
    %v417 = vpack.c.b16 %v383, %v381
    %v418 = vpack.c.b16 %v386, %v384
    %v419 = vpack.c.b16 %v387, %v385
    %452 = vmatprep.subr.bf16.mxu0 %v389
    %453 = vmatpush1.bf16.msra.mxu0 %v388
    %454 = vmatprep.subr.bf16.mxu0 %v391
    %455 = vmatpush1.bf16.msra.mxu0 %v390
    %456 = vmatprep.subr.bf16.mxu0 %v393
    %457 = vmatpush1.bf16.msra.mxu0 %v392
    %458 = vmatprep.subr.bf16.mxu0 %v395
    %459 = vmatpush1.bf16.msra.mxu0 %v394
    %460 = vmatprep.subr.bf16.mxu0 %v397
    %461 = vmatpush1.bf16.msra.mxu0 %v396
    %462 = vmatprep.subr.bf16.mxu0 %v399
    %463 = vmatpush1.bf16.msra.mxu0 %v398
    %464 = vmatprep.subr.bf16.mxu0 %v401
    %465 = vmatpush1.bf16.msra.mxu0 %v400
    %466 = vmatprep.subr.bf16.mxu0 %v403
    %467 = vmatpush1.bf16.msra.mxu0 %v402
    %468 = vmatprep.subr.bf16.mxu0 %v405
    %469 = vmatpush1.bf16.msra.mxu0 %v404
    %470 = vmatprep.subr.bf16.mxu0 %v407
    %471 = vmatpush1.bf16.msra.mxu0 %v406
    %472 = vmatprep.subr.bf16.mxu0 %v409
    %473 = vmatpush1.bf16.msra.mxu0 %v408
    %474 = vmatprep.subr.bf16.mxu0 %v411
    %475 = vmatpush1.bf16.msra.mxu0 %v410
    %476 = vmatprep.subr.bf16.mxu0 %v413
    %477 = vmatpush1.bf16.msra.mxu0 %v412
    %478 = vmatprep.subr.bf16.mxu0 %v415
    %479 = vmatpush1.bf16.msra.mxu0 %v414
    %480 = vmatprep.subr.bf16.mxu0 %v417
    %481 = vmatpush1.bf16.msra.mxu0 %v416
    %482 = vmatprep.subr.bf16.mxu0 %v419
    %483 = vmatpush1.bf16.msra.mxu0 %v418
    %484 = vmatprep.mubr.bf16.mxu0 %v247
    %485 = vmatmul.mubr.bf16.gmra.mrb[0].mxu0 %v246
    %v486 = vpop.f32.mrb[0].mxu0
    %v487 = vadd.f32 %v285, %v486
    %v488 = vpop.f32.mrb[0].mxu0
    %v489 = vadd.f32 %v289, %v488
    %v490 = vpop.f32.mrb[0].mxu0
    %v491 = vadd.f32 %v285, %v490
    %v492 = vpop.f32.mrb[0].mxu0
    %v493 = vadd.f32 %v289, %v492
    %494 = vdwg.mxu0
    %495 = vst [vmem:[#allocation8] sm:$0xff] %v487
    %496 = vst [vmem:[#allocation8 + $0x8] sm:$0xff] %v489
    %497 = vst [vmem:[#allocation8 + $0x10] sm:$0xff] %v491
    %498 = vst [vmem:[#allocation8 + $0x18] sm:$0xff] %v493
    // Predicated region
    $region34: #{tpu_custom_call.1} parent=1 // pred_check
      _
    $region35: #{tpu_custom_call.1} parent=1 // pred_check_branch
      %500 = sbr.rel (0) target = $region37
    $region36: #{tpu_custom_call.1} parent=1 // pred_region
      %s502 = ssub.s32 512, 512
      %503 = vsyncadd [#allocation4], %s502
      %s504 = sshll.u32 [#allocation8], 4
      %s505 = int_to_ptr.vmem [resolvable:$true] %s504
      %510 = dma.vmem_to_hbm [thread:$0]  %s505, 512, %s5, [#allocation4], 256, 256, 16
    $region37: #{tpu_custom_call.1} parent=1 // pred_fallthru
      _
    // Predicated region
    $region38: #{tpu_custom_call.1} parent=1 // pred_check
      _
    $region39: #{tpu_custom_call.1} parent=1 // pred_check_branch
      %512 = sbr.rel (0) target = $region41
    $region40: #{tpu_custom_call.1} parent=1 // pred_region
      %513 = dma.done [#allocation4], 512
    $region41: #{tpu_custom_call.1} parent=1 // pred_fallthru
      _
    %514 = vsyncpa [#allocation3], 1
    %515 = vsyncpa [#allocation6], 1
    %516 = vsyncpa [#allocation4], 1

// kernel: tpu_custom_call.1
$region0: #{tpu_custom_call.1}
  #allocation0 [shape = 'u32[]', space=smem, size = 0x4, offset = 0x4, fixed_abs, tag = 'smem constant byte address 0x4 - core index']
  #allocation1 [shape = 'u32[144,128]{1,0:T(1,128)}', space=vmem, size = 0x12000, scoped, tag = 'internal scratch']
  %s0 = inlined_call_operand.hbm [shape: bf16[16,128], index: 0, kind: input, shape index: {}]
  %s1 = inlined_call_operand.hbm [shape: bf16[128,256], index: 1, kind: input, shape index: {}]
  %s2 = inlined_call_operand.vmem [shape: f32[1,256], index: 2, kind: input, shape index: {}]
  %s3 = inlined_call_operand.hbm [shape: bf16[256,256], index: 3, kind: input, shape index: {}]
  %s4 = inlined_call_operand.vmem [shape: f32[1,256], index: 4, kind: input, shape index: {}]
  %s5 = inlined_call_operand.hbm [shape: f32[16,256], index: 5, kind: output, shape index: {}]
  %s6 = sld [smem:[#allocation0]]
  $region42: #{tpu_custom_call.1} parent=0
    _
  %s8 = ssub.s32 1, %s6
  %s9 = scalar_select 0, %s8, %s6
  $region1: #{tpu_custom_call.1} parent=0
    #allocation2 [shape = 'u8[4096]{0}', space=vmem, size = 0x1000, scoped, tag = 'input window, operand 0, single buffered']
    #allocation3 [shape = 's32[1]{0}', space=sflag, size = 0x4, scoped, tag = 'scoped memory for tpu_custom_call.1']
    #allocation4 [shape = 's32[1]{0}', space=sflag, size = 0x4, scoped, tag = 'scoped memory for tpu_custom_call.1']
    #allocation5 [shape = 'u8[65536]{0}', space=vmem, size = 0x10000, scoped, tag = 'input window, operand 1, single buffered']
    #allocation6 [shape = 's32[1]{0}', space=sflag, size = 0x4, scoped, tag = 'scoped memory for tpu_custom_call.1']
    #allocation7 [shape = 'u8[131072]{0}', space=vmem, size = 0x20000, scoped, tag = 'input window, operand 3, single buffered']
    #allocation8 [shape = 'u8[16384]{0}', space=vmem, size = 0x4000, scoped, tag = 'output window, operand 0, single buffered']
    %10 = vsyncpa [#allocation3], 0
    %11 = vsyncpa [#allocation6], 0
    %12 = vsyncpa [#allocation4], 0
    // Predicated region
    $region2: #{tpu_custom_call.1} parent=1 // pred_check
      _
    $region3: #{tpu_custom_call.1} parent=1 // pred_check_branch
      %14 = sbr.rel (0) target = $region5
    $region4: #{tpu_custom_call.1} parent=1 // pred_region
      %s16 = ssub.s32 128, 128
      %17 = vsyncadd [#allocation3], %s16
      %s18 = sshll.u32 [#allocation2], 4
      %s19 = int_to_ptr.vmem [resolvable:$true] %s18
      %24 = dma.hbm_to_vmem [thread:$0]  %s0, 128, %s19, [#allocation3], 64, 64, 4
    $region5: #{tpu_custom_call.1} parent=1 // pred_fallthru
      _
    // Predicated region
    $region6: #{tpu_custom_call.1} parent=1 // pred_check
      _
    $region7: #{tpu_custom_call.1} parent=1 // pred_check_branch
      %26 = sbr.rel (0) target = $region9
    $region8: #{tpu_custom_call.1} parent=1 // pred_region
      %s28 = ssub.s32 2048, 2048
      %29 = vsyncadd [#allocation6], %s28
      %s30 = sshll.u32 [#allocation5], 4
      %s31 = int_to_ptr.vmem [resolvable:$true] %s30
      %36 = dma.hbm_to_vmem [thread:$0]  %s1, 2048, %s31, [#allocation6], 128, 128, 8
    $region9: #{tpu_custom_call.1} parent=1 // pred_fallthru
      _
    // Predicated region
    $region10: #{tpu_custom_call.1} parent=1 // pred_check
      _
    $region11: #{tpu_custom_call.1} parent=1 // pred_check_branch
      %38 = sbr.rel (0) target = $region13
    $region12: #{tpu_custom_call.1} parent=1 // pred_region
      _
    $region13: #{tpu_custom_call.1} parent=1 // pred_fallthru
      _
    // Predicated region
    $region14: #{tpu_custom_call.1} parent=1 // pred_check
      _
    $region15: #{tpu_custom_call.1} parent=1 // pred_check_branch
      %40 = sbr.rel (0) target = $region17
    $region16: #{tpu_custom_call.1} parent=1 // pred_region
      %s42 = ssub.s32 4096, 4096
      %43 = vsyncadd [#allocation6], %s42
      %s44 = sshll.u32 [#allocation7], 4
      %s45 = int_to_ptr.vmem [resolvable:$true] %s44
      %50 = dma.hbm_to_vmem [thread:$0]  %s3, 4096, %s45, [#allocation6], 128, 128, 8
    $region17: #{tpu_custom_call.1} parent=1 // pred_fallthru
      _
    // Predicated region
    $region18: #{tpu_custom_call.1} parent=1 // pred_check
      _
    $region19: #{tpu_custom_call.1} parent=1 // pred_check_branch
      %52 = sbr.rel (0) target = $region21
    $region20: #{tpu_custom_call.1} parent=1 // pred_region
      _
    $region21: #{tpu_custom_call.1} parent=1 // pred_fallthru
      _
    // Predicated region
    $region22: #{tpu_custom_call.1} parent=1 // pred_check
      _
    $region23: #{tpu_custom_call.1} parent=1 // pred_check_branch
      %54 = sbr.rel (0) target = $region25
    $region24: #{tpu_custom_call.1} parent=1 // pred_region
      %55 = dma.done [#allocation3], 128
    $region25: #{tpu_custom_call.1} parent=1 // pred_fallthru
      _
    // Predicated region
    $region26: #{tpu_custom_call.1} parent=1 // pred_check
      _
    $region27: #{tpu_custom_call.1} parent=1 // pred_check_branch
      %57 = sbr.rel (0) target = $region29
    $region28: #{tpu_custom_call.1} parent=1 // pred_region
      %58 = dma.done [#allocation6], 2048
    $region29: #{tpu_custom_call.1} parent=1 // pred_fallthru
      _
    // Predicated region
    $region30: #{tpu_custom_call.1} parent=1 // pred_check
      _
    $region31: #{tpu_custom_call.1} parent=1 // pred_check_branch
      %60 = sbr.rel (0) target = $region33
    $region32: #{tpu_custom_call.1} parent=1 // pred_region
      %61 = dma.done [#allocation6], 4096
    $region33: #{tpu_custom_call.1} parent=1 // pred_fallthru
      _
    %v63 = vld [vmem:[#allocation2] sm:$0xf]
    %v64 = vld [vmem:[#allocation2 + $0x4] sm:$0xf]
    %v65 = vld [vmem:[#allocation5] sm:$0xff]
    %v66 = vld [vmem:[#allocation5 + $0x8] sm:$0xff]
    %v67 = vld [vmem:[#allocation5 + $0x10] sm:$0xff]
    %v68 = vld [vmem:[#allocation5 + $0x18] sm:$0xff]
    %v69 = vld [vmem:[#allocation5 + $0x20] sm:$0xff]
    %v70 = vld [vmem:[#allocation5 + $0x28] sm:$0xff]
    %v71 = vld [vmem:[#allocation5 + $0x30] sm:$0xff]
    %v72 = vld [vmem:[#allocation5 + $0x38] sm:$0xff]
    %v73 = vld [vmem:[#allocation5 + $0x40] sm:$0xff]
    %v74 = vld [vmem:[#allocation5 + $0x48] sm:$0xff]
    %v75 = vld [vmem:[#allocation5 + $0x50] sm:$0xff]
    %v76 = vld [vmem:[#allocation5 + $0x58] sm:$0xff]
    %v77 = vld [vmem:[#allocation5 + $0x60] sm:$0xff]
    %v78 = vld [vmem:[#allocation5 + $0x68] sm:$0xff]
    %v79 = vld [vmem:[#allocation5 + $0x70] sm:$0xff]
    %v80 = vld [vmem:[#allocation5 + $0x78] sm:$0xff]
    %v81 = vld [vmem:[%s2] sm:$0x3]
    %v83 = vlaneseq
    %v84 = vshrl.u32 %v83, 7
    %v85 = vsub.s32 0, %v84
    %v86 = vrot.slane %v81, %v85
    %v87 = vlaneseq
    %v88 = vshrl.u32 %v87, 7
    %v89 = vsub.s32 1, %v88
    %v90 = vrot.slane %v81, %v89
    %v95 = vunpack.c.l.b16 %v63
    %v96 = vunpack.c.l.b16 %v64
    %v97 = vpack.c.b16 %v96, %v95
    %v115 = vunpack.c.l.b16 %v65
    %v116 = vunpack.c.h.b16 %v65
    %v117 = vunpack.c.l.b16 %v66
    %v118 = vunpack.c.h.b16 %v66
    %v119 = vunpack.c.l.b16 %v67
    %v120 = vunpack.c.h.b16 %v67
    %v121 = vunpack.c.l.b16 %v68
    %v122 = vunpack.c.h.b16 %v68
    %v123 = vunpack.c.l.b16 %v69
    %v124 = vunpack.c.h.b16 %v69
    %v125 = vunpack.c.l.b16 %v70
    %v126 = vunpack.c.h.b16 %v70
    %v127 = vunpack.c.l.b16 %v71
    %v128 = vunpack.c.h.b16 %v71
    %v129 = vunpack.c.l.b16 %v72
    %v130 = vunpack.c.h.b16 %v72
    %v131 = vunpack.c.l.b16 %v73
    %v132 = vunpack.c.h.b16 %v73
    %v133 = vunpack.c.l.b16 %v74
    %v134 = vunpack.c.h.b16 %v74
    %v135 = vunpack.c.l.b16 %v75
    %v136 = vunpack.c.h.b16 %v75
    %v137 = vunpack.c.l.b16 %v76
    %v138 = vunpack.c.h.b16 %v76
    %v139 = vunpack.c.l.b16 %v77
    %v140 = vunpack.c.h.b16 %v77
    %v141 = vunpack.c.l.b16 %v78
    %v142 = vunpack.c.h.b16 %v78
    %v143 = vunpack.c.l.b16 %v79
    %v144 = vunpack.c.h.b16 %v79
    %v145 = vunpack.c.l.b16 %v80
    %v146 = vunpack.c.h.b16 %v80
    %v147 = vpack.c.b16 %v117, %v115
    %v148 = vpack.c.b16 %v118, %v116
    %v149 = vpack.c.b16 %v121, %v119
    %v150 = vpack.c.b16 %v122, %v120
    %v151 = vpack.c.b16 %v125, %v123
    %v152 = vpack.c.b16 %v126, %v124
    %v153 = vpack.c.b16 %v129, %v127
    %v154 = vpack.c.b16 %v130, %v128
    %v155 = vpack.c.b16 %v133, %v131
    %v156 = vpack.c.b16 %v134, %v132
    %v157 = vpack.c.b16 %v137, %v135
    %v158 = vpack.c.b16 %v138, %v136
    %v159 = vpack.c.b16 %v141, %v139
    %v160 = vpack.c.b16 %v142, %v140
    %v161 = vpack.c.b16 %v145, %v143
    %v162 = vpack.c.b16 %v146, %v144
    %179 = vmatprep.subr.bf16.mxu0 %v148
    %180 = vmatpush1.bf16.msra.mxu0 %v147
    %181 = vmatprep.subr.bf16.mxu0 %v150
    %182 = vmatpush1.bf16.msra.mxu0 %v149
    %183 = vmatprep.subr.bf16.mxu0 %v152
    %184 = vmatpush1.bf16.msra.mxu0 %v151
    %185 = vmatprep.subr.bf16.mxu0 %v154
    %186 = vmatpush1.bf16.msra.mxu0 %v153
    %187 = vmatprep.subr.bf16.mxu0 %v156
    %188 = vmatpush1.bf16.msra.mxu0 %v155
    %189 = vmatprep.subr.bf16.mxu0 %v158
    %190 = vmatpush1.bf16.msra.mxu0 %v157
    %191 = vmatprep.subr.bf16.mxu0 %v160
    %192 = vmatpush1.bf16.msra.mxu0 %v159
    %193 = vmatprep.subr.bf16.mxu0 %v162
    %194 = vmatpush1.bf16.msra.mxu0 %v161
    %195 = vmatprep.subr.bf16.mxu0 0
    %196 = vmatpush1.bf16.msra.mxu0 0
    %197 = vmatprep.subr.bf16.mxu0 0
    %198 = vmatpush1.bf16.msra.mxu0 0
    %199 = vmatprep.subr.bf16.mxu0 0
    %200 = vmatpush1.bf16.msra.mxu0 0
    %201 = vmatprep.subr.bf16.mxu0 0
    %202 = vmatpush1.bf16.msra.mxu0 0
    %203 = vmatprep.subr.bf16.mxu0 0
    %204 = vmatpush1.bf16.msra.mxu0 0
    %205 = vmatprep.subr.bf16.mxu0 0
    %206 = vmatpush1.bf16.msra.mxu0 0
    %207 = vmatprep.subr.bf16.mxu0 0
    %208 = vmatpush1.bf16.msra.mxu0 0
    %209 = vmatprep.subr.bf16.mxu0 0
    %210 = vmatpush1.bf16.msra.mxu0 0
    %211 = vmatprep.mubr.bf16.mxu0 0
    %212 = vmatmul.mubr.bf16.gmra.mrb[0].mxu0 %v97
    %v213 = vpop.f32.mrb[0].mxu0
    %v214 = vadd.f32 %v86, %v213
    %v215 = vpop.f32.mrb[0].mxu0
    %v216 = vadd.f32 %v90, %v215
    %v217 = vpop.f32.mrb[0].mxu0
    %v218 = vadd.f32 %v86, %v217
    %v219 = vpop.f32.mrb[0].mxu0
    %v220 = vadd.f32 %v90, %v219
    %221 = vdwg.mxu0
    %v222 = vxor.u32 %v214, 2147483648
    %v223 = vxor.u32 %v216, 2147483648
    %v224 = vxor.u32 %v218, 2147483648
    %v225 = vxor.u32 %v220, 2147483648
    %v226 = vmul.f32 %v222, 1.442695
    %v227 = vpow.pop %v226
    %v228 = vmul.f32 %v223, 1.442695
    %v229 = vpow.pop %v228
    %v230 = vmul.f32 %v224, 1.442695
    %v231 = vpow.pop %v230
    %v232 = vmul.f32 %v225, 1.442695
    %v233 = vpow.pop %v232
    %v234 = vadd.f32 %v227, 1.0
    %v235 = vadd.f32 %v229, 1.0
    %v236 = vadd.f32 %v231, 1.0
    %v237 = vadd.f32 %v233, 1.0
    %v238 = vrcp.pop %v234
    %v239 = vmul.f32 1.0, %v238
    %v240 = vrcp.pop %v235
    %v241 = vmul.f32 1.0, %v240
    %v242 = vrcp.pop %v236
    %v243 = vmul.f32 1.0, %v242
    %v244 = vrcp.pop %v237
    %v245 = vmul.f32 1.0, %v244
    %v246 = vpack.c.bf16 %v243, %v239
    %v247 = vpack.c.bf16 %v245, %v241
    %v248 = vld [vmem:[#allocation7] sm:$0xff]
    %v249 = vld [vmem:[#allocation7 + $0x8] sm:$0xff]
    %v250 = vld [vmem:[#allocation7 + $0x10] sm:$0xff]
    %v251 = vld [vmem:[#allocation7 + $0x18] sm:$0xff]
    %v252 = vld [vmem:[#allocation7 + $0x20] sm:$0xff]
    %v253 = vld [vmem:[#allocation7 + $0x28] sm:$0xff]
    %v254 = vld [vmem:[#allocation7 + $0x30] sm:$0xff]
    %v255 = vld [vmem:[#allocation7 + $0x38] sm:$0xff]
    %v256 = vld [vmem:[#allocation7 + $0x40] sm:$0xff]
    %v257 = vld [vmem:[#allocation7 + $0x48] sm:$0xff]
    %v258 = vld [vmem:[#allocation7 + $0x50] sm:$0xff]
    %v259 = vld [vmem:[#allocation7 + $0x58] sm:$0xff]
    %v260 = vld [vmem:[#allocation7 + $0x60] sm:$0xff]
    %v261 = vld [vmem:[#allocation7 + $0x68] sm:$0xff]
    %v262 = vld [vmem:[#allocation7 + $0x70] sm:$0xff]
    %v263 = vld [vmem:[#allocation7 + $0x78] sm:$0xff]
    %v264 = vld [vmem:[#allocation7 + $0x80] sm:$0xff]
    %v265 = vld [vmem:[#allocation7 + $0x88] sm:$0xff]
    %v266 = vld [vmem:[#allocation7 + $0x90] sm:$0xff]
    %v267 = vld [vmem:[#allocation7 + $0x98] sm:$0xff]
    %v268 = vld [vmem:[#allocation7 + $0xa0] sm:$0xff]
    %v269 = vld [vmem:[#allocation7 + $0xa8] sm:$0xff]
    %v270 = vld [vmem:[#allocation7 + $0xb0] sm:$0xff]
    %v271 = vld [vmem:[#allocation7 + $0xb8] sm:$0xff]
    %v272 = vld [vmem:[#allocation7 + $0xc0] sm:$0xff]
    %v273 = vld [vmem:[#allocation7 + $0xc8] sm:$0xff]
    %v274 = vld [vmem:[#allocation7 + $0xd0] sm:$0xff]
    %v275 = vld [vmem:[#allocation7 + $0xd8] sm:$0xff]
    %v276 = vld [vmem:[#allocation7 + $0xe0] sm:$0xff]
    %v277 = vld [vmem:[#allocation7 + $0xe8] sm:$0xff]
    %v278 = vld [vmem:[#allocation7 + $0xf0] sm:$0xff]
    %v279 = vld [vmem:[#allocation7 + $0xf8] sm:$0xff]
    %v280 = vld [vmem:[%s4] sm:$0x3]
    %v282 = vlaneseq
    %v283 = vshrl.u32 %v282, 7
    %v284 = vsub.s32 0, %v283
    %v285 = vrot.slane %v280, %v284
    %v286 = vlaneseq
    %v287 = vshrl.u32 %v286, 7
    %v288 = vsub.s32 1, %v287
    %v289 = vrot.slane %v280, %v288
    %v324 = vunpack.c.l.b16 %v248
    %v325 = vunpack.c.h.b16 %v248
    %v326 = vunpack.c.l.b16 %v249
    %v327 = vunpack.c.h.b16 %v249
    %v328 = vunpack.c.l.b16 %v250
    %v329 = vunpack.c.h.b16 %v250
    %v330 = vunpack.c.l.b16 %v251
    %v331 = vunpack.c.h.b16 %v251
    %v332 = vunpack.c.l.b16 %v252
    %v333 = vunpack.c.h.b16 %v252
    %v334 = vunpack.c.l.b16 %v253
    %v335 = vunpack.c.h.b16 %v253
    %v336 = vunpack.c.l.b16 %v254
    %v337 = vunpack.c.h.b16 %v254
    %v338 = vunpack.c.l.b16 %v255
    %v339 = vunpack.c.h.b16 %v255
    %v340 = vunpack.c.l.b16 %v256
    %v341 = vunpack.c.h.b16 %v256
    %v342 = vunpack.c.l.b16 %v257
    %v343 = vunpack.c.h.b16 %v257
    %v344 = vunpack.c.l.b16 %v258
    %v345 = vunpack.c.h.b16 %v258
    %v346 = vunpack.c.l.b16 %v259
    %v347 = vunpack.c.h.b16 %v259
    %v348 = vunpack.c.l.b16 %v260
    %v349 = vunpack.c.h.b16 %v260
    %v350 = vunpack.c.l.b16 %v261
    %v351 = vunpack.c.h.b16 %v261
    %v352 = vunpack.c.l.b16 %v262
    %v353 = vunpack.c.h.b16 %v262
    %v354 = vunpack.c.l.b16 %v263
    %v355 = vunpack.c.h.b16 %v263
    %v356 = vunpack.c.l.b16 %v264
    %v357 = vunpack.c.h.b16 %v264
    %v358 = vunpack.c.l.b16 %v265
    %v359 = vunpack.c.h.b16 %v265
    %v360 = vunpack.c.l.b16 %v266
    %v361 = vunpack.c.h.b16 %v266
    %v362 = vunpack.c.l.b16 %v267
    %v363 = vunpack.c.h.b16 %v267
    %v364 = vunpack.c.l.b16 %v268
    %v365 = vunpack.c.h.b16 %v268
    %v366 = vunpack.c.l.b16 %v269
    %v367 = vunpack.c.h.b16 %v269
    %v368 = vunpack.c.l.b16 %v270
    %v369 = vunpack.c.h.b16 %v270
    %v370 = vunpack.c.l.b16 %v271
    %v371 = vunpack.c.h.b16 %v271
    %v372 = vunpack.c.l.b16 %v272
    %v373 = vunpack.c.h.b16 %v272
    %v374 = vunpack.c.l.b16 %v273
    %v375 = vunpack.c.h.b16 %v273
    %v376 = vunpack.c.l.b16 %v274
    %v377 = vunpack.c.h.b16 %v274
    %v378 = vunpack.c.l.b16 %v275
    %v379 = vunpack.c.h.b16 %v275
    %v380 = vunpack.c.l.b16 %v276
    %v381 = vunpack.c.h.b16 %v276
    %v382 = vunpack.c.l.b16 %v277
    %v383 = vunpack.c.h.b16 %v277
    %v384 = vunpack.c.l.b16 %v278
    %v385 = vunpack.c.h.b16 %v278
    %v386 = vunpack.c.l.b16 %v279
    %v387 = vunpack.c.h.b16 %v279
    %v388 = vpack.c.b16 %v326, %v324
    %v389 = vpack.c.b16 %v327, %v325
    %v390 = vpack.c.b16 %v330, %v328
    %v391 = vpack.c.b16 %v331, %v329
    %v392 = vpack.c.b16 %v334, %v332
    %v393 = vpack.c.b16 %v335, %v333
    %v394 = vpack.c.b16 %v338, %v336
    %v395 = vpack.c.b16 %v339, %v337
    %v396 = vpack.c.b16 %v342, %v340
    %v397 = vpack.c.b16 %v343, %v341
    %v398 = vpack.c.b16 %v346, %v344
    %v399 = vpack.c.b16 %v347, %v345
    %v400 = vpack.c.b16 %v350, %v348
    %v401 = vpack.c.b16 %v351, %v349
    %v402 = vpack.c.b16 %v354, %v352
    %v403 = vpack.c.b16 %v355, %v353
    %v404 = vpack.c.b16 %v358, %v356
    %v405 = vpack.c.b16 %v359, %v357
    %v406 = vpack.c.b16 %v362, %v360
    %v407 = vpack.c.b16 %v363, %v361
    %v408 = vpack.c.b16 %v366, %v364
    %v409 = vpack.c.b16 %v367, %v365
    %v410 = vpack.c.b16 %v370, %v368
    %v411 = vpack.c.b16 %v371, %v369
    %v412 = vpack.c.b16 %v374, %v372
    %v413 = vpack.c.b16 %v375, %v373
    %v414 = vpack.c.b16 %v378, %v376
    %v415 = vpack.c.b16 %v379, %v377
    %v416 = vpack.c.b16 %v382, %v380
    %v417 = vpack.c.b16 %v383, %v381
    %v418 = vpack.c.b16 %v386, %v384
    %v419 = vpack.c.b16 %v387, %v385
    %452 = vmatprep.subr.bf16.mxu0 %v389
    %453 = vmatpush1.bf16.msra.mxu0 %v388
    %454 = vmatprep.subr.bf16.mxu0 %v391
    %455 = vmatpush1.bf16.msra.mxu0 %v390
    %456 = vmatprep.subr.bf16.mxu0 %v393
    %457 = vmatpush1.bf16.msra.mxu0 %v392
    %458 = vmatprep.subr.bf16.mxu0 %v395
    %459 = vmatpush1.bf16.msra.mxu0 %v394
    %460 = vmatprep.subr.bf16.mxu0 %v397
    %461 = vmatpush1.bf16.msra.mxu0 %v396
    %462 = vmatprep.subr.bf16.mxu0 %v399
    %463 = vmatpush1.bf16.msra.mxu0 %v398
    %464 = vmatprep.subr.bf16.mxu0 %v401
    %465 = vmatpush1.bf16.msra.mxu0 %v400
    %466 = vmatprep.subr.bf16.mxu0 %v403
    %467 = vmatpush1.bf16.msra.mxu0 %v402
    %468 = vmatprep.subr.bf16.mxu0 %v405
    %469 = vmatpush1.bf16.msra.mxu0 %v404
    %470 = vmatprep.subr.bf16.mxu0 %v407
    %471 = vmatpush1.bf16.msra.mxu0 %v406
    %472 = vmatprep.subr.bf16.mxu0 %v409
    %473 = vmatpush1.bf16.msra.mxu0 %v408
    %474 = vmatprep.subr.bf16.mxu0 %v411
    %475 = vmatpush1.bf16.msra.mxu0 %v410
    %476 = vmatprep.subr.bf16.mxu0 %v413
    %477 = vmatpush1.bf16.msra.mxu0 %v412
    %478 = vmatprep.subr.bf16.mxu0 %v415
    %479 = vmatpush1.bf16.msra.mxu0 %v414
    %480 = vmatprep.subr.bf16.mxu0 %v417
    %481 = vmatpush1.bf16.msra.mxu0 %v416
    %482 = vmatprep.subr.bf16.mxu0 %v419
    %483 = vmatpush1.bf16.msra.mxu0 %v418
    %484 = vmatprep.mubr.bf16.mxu0 %v247
    %485 = vmatmul.mubr.bf16.gmra.mrb[0].mxu0 %v246
    %v486 = vpop.f32.mrb[0].mxu0
    %v487 = vadd.f32 %v285, %v486
    %v488 = vpop.f32.mrb[0].mxu0
    %v489 = vadd.f32 %v289, %v488
    %v490 = vpop.f32.mrb[0].mxu0
    %v491 = vadd.f32 %v285, %v490
    %v492 = vpop.f32.mrb[0].mxu0
    %v493 = vadd.f32 %v289, %v492
    %494 = vdwg.mxu0
    %495 = vst [vmem:[#allocation8] sm:$0xff] %v487
    %496 = vst [vmem:[#allocation8 + $0x8] sm:$0xff] %v489
    %497 = vst [vmem:[#allocation8 + $0x10] sm:$0xff] %v491
    %498 = vst [vmem:[#allocation8 + $0x18] sm:$0xff] %v493
    // Predicated region
    $region34: #{tpu_custom_call.1} parent=1 // pred_check
      _
    $region35: #{tpu_custom_call.1} parent=1 // pred_check_branch
      %500 = sbr.rel (0) target = $region37
    $region36: #{tpu_custom_call.1} parent=1 // pred_region
      %s502 = ssub.s32 512, 512
      %503 = vsyncadd [#allocation4], %s502
      %s504 = sshll.u32 [#allocation8], 4
      %s505 = int_to_ptr.vmem [resolvable:$true] %s504
      %510 = dma.vmem_to_hbm [thread:$0]  %s505, 512, %s5, [#allocation4], 256, 256, 16
    $region37: #{tpu_custom_call.1} parent=1 // pred_fallthru
      _
    // Predicated region
    $region38: #{tpu_custom_call.1} parent=1 // pred_check
      _
    $region39: #{tpu_custom_call.1} parent=1 // pred_check_branch
      %512 = sbr.rel (0) target = $region41
    $region40: #{tpu_custom_call.1} parent=1 // pred_region
      %513 = dma.done [#allocation4], 512
    $region41: #{tpu_custom_call.1} parent=1 // pred_fallthru
      _
    %514 = vsyncpa [#allocation3], 1
    %515 = vsyncpa [#allocation6], 1
    %516 = vsyncpa [#allocation4], 1

</llo_original>
